<compile_context>
chip_gen: v5e
topology: v5e:2x2
jax: 0.10.0
libtpu: 0.0.40
codegen_flags: <defaults>
</compile_context>

<pallas_src>
import numpy as np
import jax
import jax.numpy as jnp
from jax.experimental import pallas as pl
from jax.experimental.pallas import tpu as pltpu


# ----------------------------- Pallas kernel --------------------------------
def _pos_encode_kernel(z_ref, w_ref, pos_ref, out_ref):
    # z_ref:   (TM, D)      row tile of flattened (B*N, D) tokens
    # w_ref:   (D, E_pad)   resident projection weight (zero-padded cols)
    # pos_ref: (TM, E_pad)  resident (bias + pos) tile, repeats every N rows
    # out_ref: (TM, E_pad)
    proj = jnp.dot(z_ref[...], w_ref[...],
                   preferred_element_type=jnp.float32)      # MXU, f32 acc
    out_ref[...] = (proj + pos_ref[...]).astype(out_ref.dtype)


def _batches_per_tile(B, N, target_rows=1024):
    """Largest k dividing B with k*N <= target_rows and k*N a multiple of 8."""
    best = 0
    for k in range(1, B + 1):
        if B % k == 0 and k * N <= target_rows and (k * N) % 8 == 0:
            best = k
    if best == 0:
        # Fall back to a single tile covering the whole flattened array
        # (block dim equal to the full extent bypasses the (8,128) rule).
        best = B
    return best


def positional_encoding_forward(z, w, b, pos_table):
    """z: [B, N, D] -> (tokens_embed [B, N, E], pos_table [N, E])."""
    B, N, D = z.shape
    E = w.shape[1]

    # Lane-dense output: pad embed dim up to a multiple of 128.
    E_pad = -(-E // 128) * 128
    pos_plus_b = pos_table + b[None, :]                       # fold bias (free)
    if E_pad != E:
        w_p = jnp.pad(w, ((0, 0), (0, E_pad - E)))            # zero padding
        pos_p = jnp.pad(pos_plus_b, ((0, 0), (0, E_pad - E)))
    else:
        w_p, pos_p = w, pos_plus_b

    # Flatten batch into rows and pick a large row tile (k whole batch
    # elements per tile so the resident pos tile lines up with positions).
    k = _batches_per_tile(B, N)
    TM = k * N
    grid = (B // k,)
    zf = z.reshape(B * N, D)
    pos_tile = jnp.tile(pos_p, (k, 1))                        # (TM, E_pad)

    bytes_accessed = 4 * (B * N * D + D * E_pad + TM * E_pad + B * N * E_pad)

    out = pl.pallas_call(
        _pos_encode_kernel,
        out_shape=jax.ShapeDtypeStruct((B * N, E_pad), jnp.float32),
        grid_spec=pltpu.PrefetchScalarGridSpec(
            num_scalar_prefetch=0,
            grid=grid,
            in_specs=[
                pl.BlockSpec((TM, D), lambda i: (i, 0)),       # z row tile
                pl.BlockSpec((D, E_pad), lambda i: (0, 0)),    # W (resident)
                pl.BlockSpec((TM, E_pad), lambda i: (0, 0)),   # bias+pos tile
            ],
            out_specs=pl.BlockSpec((TM, E_pad), lambda i: (i, 0)),
        ),
        compiler_params=pltpu.CompilerParams(
            dimension_semantics=("parallel",),
            vmem_limit_bytes=32 * 1024 * 1024,
        ),
        cost_estimate=pl.CostEstimate(
            flops=2 * B * N * D * E_pad,
            transcendentals=0,
            bytes_accessed=bytes_accessed,
        ),
    )(zf, w_p, pos_tile)

    tokens_embed = out[:, :E].reshape(B, N, E)
    return tokens_embed, pos_table


# --------------------------- parameter construction --------------------------
def make_sinusoidal_table(num_patches, embed_dim):
    """Standard fixed sin/cos positional table, shape (num_patches, embed_dim)."""
    pos = np.arange(num_patches, dtype=np.float32)[:, None]          # (N, 1)
    i = np.arange(embed_dim // 2, dtype=np.float32)[None, :]         # (1, E/2)
    angle = pos / np.power(10000.0, 2.0 * i / embed_dim)             # (N, E/2)
    table = np.zeros((num_patches, embed_dim), dtype=np.float32)
    table[:, 0::2] = np.sin(angle)
    table[:, 1::2] = np.cos(angle)
    return jnp.asarray(table)


def mask_size(input_size, patch_size):
    T, H, W = input_size
    pt, ph, pw = patch_size
    return (T // pt, H // pw, W // ph)


# ---------------------------------- main -------------------------------------
if __name__ == "__main__":
    # Small shapes consistent with the module's conventions.
    dim = 32
    embed_dim = 64
    patch_size = (1, 8, 8)
    input_size = (2, 16, 16)           # -> mask_size (2, 2, 2), num_patches = 8
    batch = 2

    msize = mask_size(input_size, patch_size)
    num_patches = int(np.prod(msize))

    key = jax.random.PRNGKey(0)
    kz, kw, kb = jax.random.split(key, 3)
    z = jax.random.normal(kz, (batch, num_patches, dim), dtype=jnp.float32)
    w = (jax.random.normal(kw, (dim, embed_dim), dtype=jnp.float32)
         * (1.0 / np.sqrt(dim)))
    b = 0.1 * jax.random.normal(kb, (embed_dim,), dtype=jnp.float32)
    pos_table = make_sinusoidal_table(num_patches, embed_dim)

    tokens_embed, pos_out = positional_encoding_forward(z, w, b, pos_table)
    jax.block_until_ready(tokens_embed)
    jax.block_until_ready(pos_out)

    # Reference check in plain JAX.
    ref = jnp.einsum("bnd,de->bne", z, w) + b[None, None, :] + pos_table[None]
    np.testing.assert_allclose(np.asarray(tokens_embed), np.asarray(ref),
                               rtol=1e-5, atol=1e-5)

    assert tokens_embed.shape == (batch, num_patches, embed_dim)
    assert pos_out.shape == (num_patches, embed_dim)
    print("KERNEL_OK")
</pallas_src>

<mosaic_0001>
module attributes {stable_mosaic.version = 11 : i64} {
  func.func @_pos_encode_kernel(%arg0: i32, %arg1: memref<16x32xf32, #tpu.memory_space<vmem>>, %arg2: memref<32x128xf32, #tpu.memory_space<vmem>>, %arg3: memref<16x128xf32, #tpu.memory_space<vmem>>, %arg4: memref<16x128xf32, #tpu.memory_space<vmem>>) attributes {dimension_semantics = [#tpu.dimension_semantics<parallel>], iteration_bounds = array<i64: 1>, scalar_prefetch = 0 : i64, scratch_operands = 0 : i64, tpu.core_type = #tpu.core_type<tc>, window_params = [{transform_indices = @transform_0, window_bounds = array<i64: 16, 32>}, {pipeline_mode = #tpu.pipeline_mode<synchronous>, transform_indices = @transform_1, window_bounds = array<i64: 32, 128>}, {pipeline_mode = #tpu.pipeline_mode<synchronous>, transform_indices = @transform_2, window_bounds = array<i64: 16, 128>}, {transform_indices = @transform_3, window_bounds = array<i64: 16, 128>}]} {
    %c0 = arith.constant 0 : index
    %c0_0 = arith.constant 0 : index
    %0 = vector.load %arg1[%c0, %c0_0] : memref<16x32xf32, #tpu.memory_space<vmem>>, vector<16x32xf32>
    %c0_1 = arith.constant 0 : index
    %c0_2 = arith.constant 0 : index
    %1 = vector.load %arg2[%c0_1, %c0_2] : memref<32x128xf32, #tpu.memory_space<vmem>>, vector<32x128xf32>
    %cst = arith.constant dense<0.000000e+00> : vector<16x128xf32>
    %2 = tpu.matmul %0, %1, %cst {dimension_numbers = #tpu.dot_dimension_numbers<[1], [0], [0], [1], [0, 0, 1, 1], [], []>} : vector<16x32xf32>, vector<32x128xf32>, vector<16x128xf32> -> vector<16x128xf32>
    %c0_3 = arith.constant 0 : index
    %c0_4 = arith.constant 0 : index
    %3 = vector.load %arg3[%c0_3, %c0_4] : memref<16x128xf32, #tpu.memory_space<vmem>>, vector<16x128xf32>
    %4 = arith.addf %2, %3 : vector<16x128xf32>
    %c0_5 = arith.constant 0 : index
    %c0_6 = arith.constant 0 : index
    %5 = vector.load %arg4[%c0_5, %c0_6] : memref<16x128xf32, #tpu.memory_space<vmem>>, vector<16x128xf32>
    tpu.vector_store %arg4[%c0_5, %c0_6], %4 {strides = array<i32>} : memref<16x128xf32, #tpu.memory_space<vmem>>, vector<16x128xf32>,
    return
  }
  func.func @transform_0(%arg0: i32) -> (i32, i32) {
    %c0_i32 = arith.constant 0 : i32
    %c0_i32_0 = arith.constant 0 : i32
    return %arg0, %c0_i32 : i32, i32
  }
  func.func @transform_1(%arg0: i32) -> (i32, i32) {
    %c0_i32 = arith.constant 0 : i32
    %c0_i32_0 = arith.constant 0 : i32
    %c0_i32_1 = arith.constant 0 : i32
    return %c0_i32, %c0_i32_0 : i32, i32
  }
  func.func @transform_2(%arg0: i32) -> (i32, i32) {
    %c0_i32 = arith.constant 0 : i32
    %c0_i32_0 = arith.constant 0 : i32
    %c0_i32_1 = arith.constant 0 : i32
    return %c0_i32, %c0_i32_0 : i32, i32
  }
  func.func @transform_3(%arg0: i32) -> (i32, i32) {
    %c0_i32 = arith.constant 0 : i32
    %c0_i32_0 = arith.constant 0 : i32
    return %arg0, %c0_i32 : i32, i32
  }
}

</mosaic_0001>

<llo_original>
// kernel: tpu_custom_call.1
$region0: #{tpu_custom_call.1}
  #allocation0 [shape = 'u32[]', space=smem, size = 0x4, offset = 0x4, fixed_abs, tag = 'smem constant byte address 0x4 - core index']
  #allocation1 [shape = 'u32[72,128]{1,0:T(1,128)}', space=vmem, size = 0x9000, scoped, tag = 'internal scratch']
  %s0 = inlined_call_operand.hbm [shape: f32[16,32], index: 0, kind: input, shape index: {}]
  %s1 = inlined_call_operand.hbm [shape: f32[32,128], index: 1, kind: input, shape index: {}]
  %s2 = inlined_call_operand.hbm [shape: f32[16,128], index: 2, kind: input, shape index: {}]
  %s3 = inlined_call_operand.hbm [shape: f32[16,128], index: 3, kind: output, shape index: {}]
  %s4 = sld [smem:[#allocation0]]
  $region34: #{tpu_custom_call.1} parent=0
    _
  %s6 = ssub.s32 1, %s4
  %s7 = scalar_select 0, %s6, %s4
  $region1: #{tpu_custom_call.1} parent=0
    #allocation2 [shape = 'u8[8192]{0}', space=vmem, size = 0x2000, scoped, tag = 'input window, operand 0, single buffered']
    #allocation3 [shape = 's32[1]{0}', space=sflag, size = 0x4, scoped, tag = 'scoped memory for tpu_custom_call.1']
    #allocation4 [shape = 's32[1]{0}', space=sflag, size = 0x4, scoped, tag = 'scoped memory for tpu_custom_call.1']
    #allocation5 [shape = 'u8[16384]{0}', space=vmem, size = 0x4000, scoped, tag = 'input window, operand 1, single buffered']
    #allocation6 [shape = 's32[1]{0}', space=sflag, size = 0x4, scoped, tag = 'scoped memory for tpu_custom_call.1']
    #allocation7 [shape = 'u8[8192]{0}', space=vmem, size = 0x2000, scoped, tag = 'input window, operand 2, single buffered']
    #allocation8 [shape = 'u8[8192]{0}', space=vmem, size = 0x2000, scoped, tag = 'output window, operand 0, single buffered']
    %8 = vsyncpa [#allocation3], 0
    %9 = vsyncpa [#allocation6], 0
    %10 = vsyncpa [#allocation4], 0
    // Predicated region
    $region2: #{tpu_custom_call.1} parent=1 // pred_check
      _
    $region3: #{tpu_custom_call.1} parent=1 // pred_check_branch
      %12 = sbr.rel (0) target = $region5
    $region4: #{tpu_custom_call.1} parent=1 // pred_region
      %14 = vsyncadd [#allocation3], 0
      %s15 = sshll.u32 %s0, 4
      %s16 = int_to_ptr.hbm [resolvable:$true] %s15
      %s17 = sshll.u32 [#allocation2], 4
      %s18 = int_to_ptr.vmem [resolvable:$true] %s17
      %23 = dma.hbm_to_vmem [thread:$0]  %s16, 256, %s18, [#allocation3], 128, 128, 8
    $region5: #{tpu_custom_call.1} parent=1 // pred_fallthru
      _
    // Predicated region
    $region6: #{tpu_custom_call.1} parent=1 // pred_check
      _
    $region7: #{tpu_custom_call.1} parent=1 // pred_check_branch
      %25 = sbr.rel (0) target = $region9
    $region8: #{tpu_custom_call.1} parent=1 // pred_region
      %27 = vsyncadd [#allocation6], 0
      %s28 = sshll.u32 %s1, 4
      %s29 = int_to_ptr.hbm [resolvable:$true] %s28
      %s30 = sshll.u32 [#allocation5], 4
      %s31 = int_to_ptr.vmem [resolvable:$true] %s30
      %36 = dma.hbm_to_vmem [thread:$0]  %s29, 512, %s31, [#allocation6], 128, 128, 8
    $region9: #{tpu_custom_call.1} parent=1 // pred_fallthru
      _
    // Predicated region
    $region10: #{tpu_custom_call.1} parent=1 // pred_check
      _
    $region11: #{tpu_custom_call.1} parent=1 // pred_check_branch
      %38 = sbr.rel (0) target = $region13
    $region12: #{tpu_custom_call.1} parent=1 // pred_region
      %40 = vsyncadd [#allocation6], 0
      %s41 = sshll.u32 %s2, 4
      %s42 = int_to_ptr.hbm [resolvable:$true] %s41
      %s43 = sshll.u32 [#allocation7], 4
      %s44 = int_to_ptr.vmem [resolvable:$true] %s43
      %49 = dma.hbm_to_vmem [thread:$0]  %s42, 256, %s44, [#allocation6], 128, 128, 8
    $region13: #{tpu_custom_call.1} parent=1 // pred_fallthru
      _
    // Predicated region
    $region14: #{tpu_custom_call.1} parent=1 // pred_check
      _
    $region15: #{tpu_custom_call.1} parent=1 // pred_check_branch
      %51 = sbr.rel (0) target = $region17
    $region16: #{tpu_custom_call.1} parent=1 // pred_region
      %53 = dma.done [#allocation3], 256
    $region17: #{tpu_custom_call.1} parent=1 // pred_fallthru
      _
    // Predicated region
    $region18: #{tpu_custom_call.1} parent=1 // pred_check
      _
    $region19: #{tpu_custom_call.1} parent=1 // pred_check_branch
      %55 = sbr.rel (0) target = $region21
    $region20: #{tpu_custom_call.1} parent=1 // pred_region
      %57 = dma.done [#allocation6], 512
    $region21: #{tpu_custom_call.1} parent=1 // pred_fallthru
      _
    // Predicated region
    $region22: #{tpu_custom_call.1} parent=1 // pred_check
      _
    $region23: #{tpu_custom_call.1} parent=1 // pred_check_branch
      %59 = sbr.rel (0) target = $region25
    $region24: #{tpu_custom_call.1} parent=1 // pred_region
      %61 = dma.done [#allocation6], 256
    $region25: #{tpu_custom_call.1} parent=1 // pred_fallthru
      _
    %v62 = vld [vmem:[#allocation2] sm:$0xff]
    %v63 = vld [vmem:[#allocation2 + $0x8] sm:$0xff]
    %v64 = vld [vmem:[#allocation5] sm:$0xff]
    %v65 = vld [vmem:[#allocation5 + $0x8] sm:$0xff]
    %v66 = vld [vmem:[#allocation5 + $0x10] sm:$0xff]
    %v67 = vld [vmem:[#allocation5 + $0x18] sm:$0xff]
    %v68 = vld [vmem:[#allocation7] sm:$0xff]
    %v69 = vld [vmem:[#allocation7 + $0x8] sm:$0xff]
    %vm70 = vcmask 261120
    %v72 = vsel %vm70, %v62, 0
    %v75 = vsel %vm70, %v63, 0
    %77 = vmatpush.msra.mxu0 0.0
    %78 = vmatpush.msra.mxu0 0.0
    %79 = vmatpush.msra.mxu0 0.0
    %80 = vmatpush.msra.mxu0 0.0
    %81 = vmatpush.msra.mxu0 0.0
    %82 = vmatpush.msra.mxu0 0.0
    %83 = vmatpush.msra.mxu0 0.0
    %84 = vmatpush.msra.mxu0 0.0
    %85 = vmatpush.msra.mxu0 0.0
    %86 = vmatpush.msra.mxu0 0.0
    %87 = vmatpush.msra.mxu0 0.0
    %88 = vmatpush.msra.mxu0 0.0
    %89 = vmatpush.msra.mxu0 %v67
    %90 = vmatpush.msra.mxu0 %v66
    %91 = vmatpush.msra.mxu0 %v65
    %92 = vmatpush.msra.mxu0 %v64
    %93 = vmatmul.f32.gmra.mxu0 %v72
    %v94 = vpop.f32.mrf.mxu0
    %v95 = vadd.f32 %v68, %v94
    %96 = vmatmul.f32.gmra.mxu0 %v75
    %v97 = vpop.f32.mrf.mxu0
    %v98 = vadd.f32 %v69, %v97
    %99 = vdwg.mxu0
    %100 = vst [vmem:[#allocation8] sm:$0xff] %v95
    %101 = vst [vmem:[#allocation8 + $0x8] sm:$0xff] %v98
    // Predicated region
    $region26: #{tpu_custom_call.1} parent=1 // pred_check
      _
    $region27: #{tpu_custom_call.1} parent=1 // pred_check_branch
      %103 = sbr.rel (0) target = $region29
    $region28: #{tpu_custom_call.1} parent=1 // pred_region
      %105 = vsyncadd [#allocation4], 0
      %s106 = sshll.u32 [#allocation8], 4
      %s107 = int_to_ptr.vmem [resolvable:$true] %s106
      %s108 = sshll.u32 %s3, 4
      %s109 = int_to_ptr.hbm [resolvable:$true] %s108
      %114 = dma.vmem_to_hbm [thread:$0]  %s107, 256, %s109, [#allocation4], 128, 128, 8
    $region29: #{tpu_custom_call.1} parent=1 // pred_fallthru
      _
    // Predicated region
    $region30: #{tpu_custom_call.1} parent=1 // pred_check
      _
    $region31: #{tpu_custom_call.1} parent=1 // pred_check_branch
      %116 = sbr.rel (0) target = $region33
    $region32: #{tpu_custom_call.1} parent=1 // pred_region
      %118 = dma.done [#allocation4], 256
    $region33: #{tpu_custom_call.1} parent=1 // pred_fallthru
      _
    %119 = vsyncpa [#allocation3], 1
    %120 = vsyncpa [#allocation6], 1
    %121 = vsyncpa [#allocation4], 1

</llo_original>
